<compile_context>
chip_gen: v5e
topology: v5e:2x2
jax: 0.10.0
libtpu: 0.0.40
codegen_flags: <defaults>
</compile_context>

<pallas_src>
import functools

import jax
import jax.numpy as jnp
from jax.experimental import pallas as pl
from jax.experimental.pallas import tpu as pltpu

# -------------------- model configuration (small, synthetic) --------------------
VOCAB_SIZE  = 16
EMBED_SIZE  = 32
HIDDEN_SIZE = 32
OUTPUT_SIZE = 4
BATCH_SIZE  = 2
SEQ_LEN     = 8

_SUBLANE = 8   # f32 sublane group


# -------------------- Pallas kernel: LSTM recurrence + linear + log_softmax -----
def _lstm_head_kernel(xproj_ref, w_ref, out_ref, *, out_size):
    """Grid-less single invocation; everything is VMEM-resident.

    xproj_ref : (T*BP, 4H) precomputed x_t @ W_ih^T + (b_ih+b_hh),
                gate order (i, f, o, g), time-major, batch padded to BP.
    w_ref     : (2H+8, 4H) packed weight slab:
                  rows [0:H)    = W_hh^T (gate order i,f,o,g)
                  rows [H:2H)   = W_lin^T padded to 4H lanes (cols [0:O))
                  row  2H       = b_lin padded to 4H lanes  (cols [0:O))
    out_ref   : (BP, 4H) packed output:
                  lanes [0:H)=h_final, [H:2H)=c_final, [2H:2H+O)=log-probs.
    """
    BP = out_ref.shape[0]
    H4 = out_ref.shape[1]
    H = H4 // 4
    T = xproj_ref.shape[0] // BP

    # Static row slices of the single packed weight slab (loads, no extra DMA).
    whh_t = w_ref[0:H, :]                    # (H, 4H)
    w_lin = w_ref[H:2 * H, :]                # (H, 4H), cols [0:O) are real
    b_lin = w_ref[2 * H:2 * H + 1, :]        # (1, 4H), cols [0:O) are real

    def step(t, carry):
        h, c = carry
        row = pl.multiple_of(t * BP, BP)
        gates = (xproj_ref[pl.ds(row, BP), :]
                 + jnp.dot(h, whh_t, preferred_element_type=jnp.float32))
        # gate order (i, f, o, g): one sigmoid pass over 3H lanes, one tanh over H.
        # NOTE: the (8,32) lane slices below are epilogue-of-step extracts; if a
        # bundle dump ever shows costly XLU lane moves here, switch to full-vreg
        # activations + pltpu.roll alignment.
        sig = jax.nn.sigmoid(gates[:, :3 * H])
        i_g = sig[:, 0 * H:1 * H]
        f_g = sig[:, 1 * H:2 * H]
        o_g = sig[:, 2 * H:3 * H]
        g_g = jnp.tanh(gates[:, 3 * H:])
        c_new = f_g * c + i_g * g_g
        h_new = o_g * jnp.tanh(c_new)
        return h_new, c_new

    h0 = jnp.zeros((BP, H), jnp.float32)
    c0 = jnp.zeros((BP, H), jnp.float32)
    h_fin, c_fin = jax.lax.fori_loop(0, T, step, (h0, c0), unroll=True)

    # Fused linear head + masked log_softmax over the first `out_size` lanes.
    logits = (jnp.dot(h_fin, w_lin, preferred_element_type=jnp.float32) + b_lin)
    lane = jax.lax.broadcasted_iota(jnp.int32, logits.shape, 1)
    z = jnp.where(lane < out_size, logits, jnp.float32(-1e30))
    m = jnp.max(z, axis=1, keepdims=True)
    zz = z - m
    lse = jnp.log(jnp.sum(jnp.exp(zz), axis=1, keepdims=True))
    logp = zz - lse                           # (BP, 4H); real values in [0:O)

    lane2 = jax.lax.broadcasted_iota(jnp.int32, (BP, 2 * H), 1)
    logp_pad = jnp.where(lane2 < out_size, logp[:, :2 * H], jnp.float32(0.0))

    # Single lane-dense 128-wide store (one unmasked vst, one writeback DMA).
    out_ref[...] = jnp.concatenate([h_fin, c_fin, logp_pad], axis=1)


# -------------------- one-time parameter preparation (outside the jit) ----------
def prepare_params(params):
    """Fold embedding + W_ih + biases into a vocab-sized projection table and
    pack all recurrent/head weights into one lane-dense slab."""
    H, O = HIDDEN_SIZE, OUTPUT_SIZE
    hp = jax.lax.Precision.HIGHEST

    # Gate reorder (i, f, g, o) -> (i, f, o, g): sigmoid on one contiguous 3H block.
    perm = jnp.concatenate([jnp.arange(0, H), jnp.arange(H, 2 * H),
                            jnp.arange(3 * H, 4 * H), jnp.arange(2 * H, 3 * H)])
    w_ih_p = params["w_ih"][perm].astype(jnp.float32)          # (4H, E)
    w_hh_p = params["w_hh"][perm].astype(jnp.float32)          # (4H, H)
    bias = (params["b_ih"] + params["b_hh"])[perm].astype(jnp.float32)

    # (VOCAB, 4H) = (16, 128): per-token input projection + bias, computed once.
    proj_table = (jnp.dot(params["pretrained"].astype(jnp.float32), w_ih_p.T,
                          precision=hp) + bias)

    # Packed weight slab (2H+8, 4H) = (72, 128).
    w_slab = jnp.zeros((2 * H + _SUBLANE, 4 * H), jnp.float32)
    w_slab = w_slab.at[0:H, :].set(w_hh_p.T)                                   # W_hh^T
    w_slab = w_slab.at[H:2 * H, 0:O].set(params["w_lin"].T.astype(jnp.float32))  # W_lin^T
    w_slab = w_slab.at[2 * H, 0:O].set(params["b_lin"].astype(jnp.float32))      # b_lin
    return {"proj_table": proj_table, "w_slab": w_slab}


# -------------------- kernel wrapper --------------------------------------------
def lstm_head(xproj, w_slab):
    """xproj: (T, B, 4H) precomputed input projection.
    Returns (log_probs (B,O), h (B,H), c (B,H))."""
    T, B, H4 = xproj.shape
    H = H4 // 4
    O = OUTPUT_SIZE
    BP = ((B + _SUBLANE - 1) // _SUBLANE) * _SUBLANE

    # Pad batch to a full sublane group (padded rows compute garbage-but-finite
    # values and are sliced off below).  If the serving batch grows, fill these
    # rows with real sequences instead of zeros.
    if BP != B:
        xproj = jnp.concatenate(
            [xproj, jnp.zeros((T, BP - B, H4), xproj.dtype)], axis=1)
    x_flat = xproj.reshape(T * BP, H4).astype(jnp.float32)     # (T*BP, 128)

    out = pl.pallas_call(
        functools.partial(_lstm_head_kernel, out_size=O),
        out_shape=jax.ShapeDtypeStruct((BP, H4), jnp.float32),
        in_specs=[pl.BlockSpec(memory_space=pltpu.MemorySpace.VMEM),
                  pl.BlockSpec(memory_space=pltpu.MemorySpace.VMEM)],
        out_specs=pl.BlockSpec(memory_space=pltpu.MemorySpace.VMEM),
    )(x_flat, w_slab)

    h = out[:B, 0:H]
    c = out[:B, H:2 * H]
    logp = out[:B, 2 * H:2 * H + O]
    return logp, h, c


# -------------------- full forward matching the PyTorch module ------------------
def rnn_forward(inputs, prep):
    """inputs: (T, B, 1) int32 token ids; prep: output of prepare_params.

    Returns (output, hidden, cell) with PyTorch shapes:
      output: (B, OUTPUT_SIZE) log-probabilities
      hidden: (1, B, HIDDEN_SIZE)
      cell  : (1, B, HIDDEN_SIZE)
    """
    # embedding + W_ih projection fused into one table gather (glue, plain XLA).
    xproj = prep["proj_table"][inputs[..., 0]]          # (T, B, 4H)
    logp, h, c = lstm_head(xproj, prep["w_slab"])
    return logp, h[None, ...], c[None, ...]


# -------------------- pure-JAX reference (correctness check) --------------------
def rnn_forward_ref(inputs, params):
    emb = params["pretrained"][inputs[..., 0]].astype(jnp.float32)
    T, B, _ = emb.shape
    H = HIDDEN_SIZE
    hp = jax.lax.Precision.HIGHEST
    w_ih, w_hh = params["w_ih"], params["w_hh"]
    bias = params["b_ih"] + params["b_hh"]
    h = jnp.zeros((B, H), jnp.float32)
    c = jnp.zeros((B, H), jnp.float32)
    for t in range(T):
        g = (jnp.dot(emb[t], w_ih.T, precision=hp)
             + jnp.dot(h, w_hh.T, precision=hp) + bias)
        i_g = jax.nn.sigmoid(g[:, 0 * H:1 * H])
        f_g = jax.nn.sigmoid(g[:, 1 * H:2 * H])
        g_g = jnp.tanh(g[:, 2 * H:3 * H])
        o_g = jax.nn.sigmoid(g[:, 3 * H:4 * H])
        c = f_g * c + i_g * g_g
        h = o_g * jnp.tanh(c)
    logits = jnp.dot(h, params["w_lin"].T, precision=hp) + params["b_lin"]
    logp = jax.nn.log_softmax(logits, axis=1)
    return logp, h[None, ...], c[None, ...]


def init_params(key):
    ks = jax.random.split(key, 7)
    H, E, O, V = HIDDEN_SIZE, EMBED_SIZE, OUTPUT_SIZE, VOCAB_SIZE
    scale = 1.0 / jnp.sqrt(H)
    return {
        "pretrained": jax.random.normal(ks[0], (V, E), jnp.float32),
        # PyTorch LSTM weights, gate order (i, f, g, o)
        "w_ih": jax.random.uniform(ks[1], (4 * H, E), jnp.float32, -scale, scale),
        "w_hh": jax.random.uniform(ks[2], (4 * H, H), jnp.float32, -scale, scale),
        "b_ih": jax.random.uniform(ks[3], (4 * H,), jnp.float32, -scale, scale),
        "b_hh": jax.random.uniform(ks[4], (4 * H,), jnp.float32, -scale, scale),
        # nn.Linear(H, O)
        "w_lin": jax.random.uniform(ks[5], (O, H), jnp.float32, -scale, scale),
        "b_lin": jax.random.uniform(ks[6], (O,), jnp.float32, -scale, scale),
    }


if __name__ == "__main__":
    key = jax.random.PRNGKey(0)
    params = init_params(key)
    prep = prepare_params(params)            # one-time packing, outside the jit

    tok_key = jax.random.fold_in(key, 123)
    inputs = jax.random.randint(
        tok_key, (SEQ_LEN, BATCH_SIZE, 1), 0, VOCAB_SIZE, dtype=jnp.int32)

    forward = jax.jit(rnn_forward)
    output, hidden, cell = jax.block_until_ready(forward(inputs, prep))

    assert output.shape == (BATCH_SIZE, OUTPUT_SIZE)
    assert hidden.shape == (1, BATCH_SIZE, HIDDEN_SIZE)
    assert cell.shape == (1, BATCH_SIZE, HIDDEN_SIZE)
    # log_softmax rows must sum to 1 in prob space
    assert jnp.allclose(jnp.exp(output).sum(axis=1), 1.0, atol=1e-5)

    # compare against the pure-JAX reference
    ref_out, ref_h, ref_c = rnn_forward_ref(inputs, params)
    assert jnp.allclose(output, ref_out, atol=1e-2, rtol=1e-2)
    assert jnp.allclose(hidden, ref_h, atol=1e-2, rtol=1e-2)
    assert jnp.allclose(cell, ref_c, atol=1e-2, rtol=1e-2)

    print("KERNEL_OK")
</pallas_src>

<mosaic_0001>
module attributes {stable_mosaic.version = 11 : i64} {
  func.func @_lstm_head_kernel(%arg0: memref<64x128xf32, #tpu.memory_space<vmem>>, %arg1: memref<72x128xf32, #tpu.memory_space<vmem>>, %arg2: memref<8x128xf32, #tpu.memory_space<vmem>>) attributes {dimension_semantics = [], scalar_prefetch = 0 : i64, scratch_operands = 0 : i64, tpu.core_type = #tpu.core_type<tc>} {
    %c0 = arith.constant 0 : index
    %c0_0 = arith.constant 0 : index
    %0 = vector.load %arg1[%c0, %c0_0] : memref<72x128xf32, #tpu.memory_space<vmem>>, vector<32x128xf32>
    %c32 = arith.constant 32 : index
    %c0_1 = arith.constant 0 : index
    %1 = vector.load %arg1[%c32, %c0_1] : memref<72x128xf32, #tpu.memory_space<vmem>>, vector<32x128xf32>
    %c64 = arith.constant 64 : index
    %c0_2 = arith.constant 0 : index
    %2 = vector.load %arg1[%c64, %c0_2] : memref<72x128xf32, #tpu.memory_space<vmem>>, vector<1x128xf32>
    %cst = arith.constant 0.000000e+00 : f32
    %3 = vector.broadcast %cst : f32 to vector<8x32xf32>
    %cst_3 = arith.constant 0.000000e+00 : f32
    %4 = vector.broadcast %cst_3 : f32 to vector<8x32xf32>
    %c0_i32 = arith.constant 0 : i32
    %c8_i32 = arith.constant 8 : i32
    %5 = arith.muli %c0_i32, %c8_i32 : i32
    %6 = tpu.assume_multiple %5, 8 : i32
    %7 = arith.index_cast %6 : i32 to index
    %c0_4 = arith.constant 0 : index
    %8 = vector.load %arg0[%7, %c0_4] : memref<64x128xf32, #tpu.memory_space<vmem>>, vector<8x128xf32>
    %cst_5 = arith.constant dense<0.000000e+00> : vector<8x128xf32>
    %9 = tpu.matmul %3, %0, %cst_5 {dimension_numbers = #tpu.dot_dimension_numbers<[1], [0], [0], [1], [0, 0, 1, 1], [], []>} : vector<8x32xf32>, vector<32x128xf32>, vector<8x128xf32> -> vector<8x128xf32>
    %10 = arith.addf %8, %9 : vector<8x128xf32>
    %11 = vector.extract_strided_slice %10 {offsets = [0, 0], sizes = [8, 96], strides = [1, 1]} : vector<8x128xf32> to vector<8x96xf32>
    %12 = arith.negf %11 : vector<8x96xf32>
    %13 = math.exp %12 : vector<8x96xf32>
    %cst_6 = arith.constant 1.000000e+00 : f32
    %14 = vector.broadcast %cst_6 : f32 to vector<8x96xf32>
    %15 = arith.addf %14, %13 : vector<8x96xf32>
    %16 = arith.divf %14, %15 : vector<8x96xf32>
    %17 = vector.extract_strided_slice %16 {offsets = [0, 0], sizes = [8, 32], strides = [1, 1]} : vector<8x96xf32> to vector<8x32xf32>
    %18 = vector.extract_strided_slice %16 {offsets = [0, 32], sizes = [8, 32], strides = [1, 1]} : vector<8x96xf32> to vector<8x32xf32>
    %19 = vector.extract_strided_slice %16 {offsets = [0, 64], sizes = [8, 32], strides = [1, 1]} : vector<8x96xf32> to vector<8x32xf32>
    %20 = vector.extract_strided_slice %10 {offsets = [0, 96], sizes = [8, 32], strides = [1, 1]} : vector<8x128xf32> to vector<8x32xf32>
    %21 = math.tanh %20 : vector<8x32xf32>
    %22 = arith.mulf %18, %4 : vector<8x32xf32>
    %23 = arith.mulf %17, %21 : vector<8x32xf32>
    %24 = arith.addf %22, %23 : vector<8x32xf32>
    %25 = math.tanh %24 : vector<8x32xf32>
    %26 = arith.mulf %19, %25 : vector<8x32xf32>
    %c1_i32 = arith.constant 1 : i32
    %c8_i32_7 = arith.constant 8 : i32
    %27 = arith.muli %c1_i32, %c8_i32_7 : i32
    %28 = tpu.assume_multiple %27, 8 : i32
    %29 = arith.index_cast %28 : i32 to index
    %c0_8 = arith.constant 0 : index
    %30 = vector.load %arg0[%29, %c0_8] : memref<64x128xf32, #tpu.memory_space<vmem>>, vector<8x128xf32>
    %cst_9 = arith.constant dense<0.000000e+00> : vector<8x128xf32>
    %31 = tpu.matmul %26, %0, %cst_9 {dimension_numbers = #tpu.dot_dimension_numbers<[1], [0], [0], [1], [0, 0, 1, 1], [], []>} : vector<8x32xf32>, vector<32x128xf32>, vector<8x128xf32> -> vector<8x128xf32>
    %32 = arith.addf %30, %31 : vector<8x128xf32>
    %33 = vector.extract_strided_slice %32 {offsets = [0, 0], sizes = [8, 96], strides = [1, 1]} : vector<8x128xf32> to vector<8x96xf32>
    %34 = arith.negf %33 : vector<8x96xf32>
    %35 = math.exp %34 : vector<8x96xf32>
    %cst_10 = arith.constant 1.000000e+00 : f32
    %36 = vector.broadcast %cst_10 : f32 to vector<8x96xf32>
    %37 = arith.addf %36, %35 : vector<8x96xf32>
    %38 = arith.divf %36, %37 : vector<8x96xf32>
    %39 = vector.extract_strided_slice %38 {offsets = [0, 0], sizes = [8, 32], strides = [1, 1]} : vector<8x96xf32> to vector<8x32xf32>
    %40 = vector.extract_strided_slice %38 {offsets = [0, 32], sizes = [8, 32], strides = [1, 1]} : vector<8x96xf32> to vector<8x32xf32>
    %41 = vector.extract_strided_slice %38 {offsets = [0, 64], sizes = [8, 32], strides = [1, 1]} : vector<8x96xf32> to vector<8x32xf32>
    %42 = vector.extract_strided_slice %32 {offsets = [0, 96], sizes = [8, 32], strides = [1, 1]} : vector<8x128xf32> to vector<8x32xf32>
    %43 = math.tanh %42 : vector<8x32xf32>
    %44 = arith.mulf %40, %24 : vector<8x32xf32>
    %45 = arith.mulf %39, %43 : vector<8x32xf32>
    %46 = arith.addf %44, %45 : vector<8x32xf32>
    %47 = math.tanh %46 : vector<8x32xf32>
    %48 = arith.mulf %41, %47 : vector<8x32xf32>
    %c2_i32 = arith.constant 2 : i32
    %c8_i32_11 = arith.constant 8 : i32
    %49 = arith.muli %c2_i32, %c8_i32_11 : i32
    %50 = tpu.assume_multiple %49, 8 : i32
    %51 = arith.index_cast %50 : i32 to index
    %c0_12 = arith.constant 0 : index
    %52 = vector.load %arg0[%51, %c0_12] : memref<64x128xf32, #tpu.memory_space<vmem>>, vector<8x128xf32>
    %cst_13 = arith.constant dense<0.000000e+00> : vector<8x128xf32>
    %53 = tpu.matmul %48, %0, %cst_13 {dimension_numbers = #tpu.dot_dimension_numbers<[1], [0], [0], [1], [0, 0, 1, 1], [], []>} : vector<8x32xf32>, vector<32x128xf32>, vector<8x128xf32> -> vector<8x128xf32>
    %54 = arith.addf %52, %53 : vector<8x128xf32>
    %55 = vector.extract_strided_slice %54 {offsets = [0, 0], sizes = [8, 96], strides = [1, 1]} : vector<8x128xf32> to vector<8x96xf32>
    %56 = arith.negf %55 : vector<8x96xf32>
    %57 = math.exp %56 : vector<8x96xf32>
    %cst_14 = arith.constant 1.000000e+00 : f32
    %58 = vector.broadcast %cst_14 : f32 to vector<8x96xf32>
    %59 = arith.addf %58, %57 : vector<8x96xf32>
    %60 = arith.divf %58, %59 : vector<8x96xf32>
    %61 = vector.extract_strided_slice %60 {offsets = [0, 0], sizes = [8, 32], strides = [1, 1]} : vector<8x96xf32> to vector<8x32xf32>
    %62 = vector.extract_strided_slice %60 {offsets = [0, 32], sizes = [8, 32], strides = [1, 1]} : vector<8x96xf32> to vector<8x32xf32>
    %63 = vector.extract_strided_slice %60 {offsets = [0, 64], sizes = [8, 32], strides = [1, 1]} : vector<8x96xf32> to vector<8x32xf32>
    %64 = vector.extract_strided_slice %54 {offsets = [0, 96], sizes = [8, 32], strides = [1, 1]} : vector<8x128xf32> to vector<8x32xf32>
    %65 = math.tanh %64 : vector<8x32xf32>
    %66 = arith.mulf %62, %46 : vector<8x32xf32>
    %67 = arith.mulf %61, %65 : vector<8x32xf32>
    %68 = arith.addf %66, %67 : vector<8x32xf32>
    %69 = math.tanh %68 : vector<8x32xf32>
    %70 = arith.mulf %63, %69 : vector<8x32xf32>
    %c3_i32 = arith.constant 3 : i32
    %c8_i32_15 = arith.constant 8 : i32
    %71 = arith.muli %c3_i32, %c8_i32_15 : i32
    %72 = tpu.assume_multiple %71, 8 : i32
    %73 = arith.index_cast %72 : i32 to index
    %c0_16 = arith.constant 0 : index
    %74 = vector.load %arg0[%73, %c0_16] : memref<64x128xf32, #tpu.memory_space<vmem>>, vector<8x128xf32>
    %cst_17 = arith.constant dense<0.000000e+00> : vector<8x128xf32>
    %75 = tpu.matmul %70, %0, %cst_17 {dimension_numbers = #tpu.dot_dimension_numbers<[1], [0], [0], [1], [0, 0, 1, 1], [], []>} : vector<8x32xf32>, vector<32x128xf32>, vector<8x128xf32> -> vector<8x128xf32>
    %76 = arith.addf %74, %75 : vector<8x128xf32>
    %77 = vector.extract_strided_slice %76 {offsets = [0, 0], sizes = [8, 96], strides = [1, 1]} : vector<8x128xf32> to vector<8x96xf32>
    %78 = arith.negf %77 : vector<8x96xf32>
    %79 = math.exp %78 : vector<8x96xf32>
    %cst_18 = arith.constant 1.000000e+00 : f32
    %80 = vector.broadcast %cst_18 : f32 to vector<8x96xf32>
    %81 = arith.addf %80, %79 : vector<8x96xf32>
    %82 = arith.divf %80, %81 : vector<8x96xf32>
    %83 = vector.extract_strided_slice %82 {offsets = [0, 0], sizes = [8, 32], strides = [1, 1]} : vector<8x96xf32> to vector<8x32xf32>
    %84 = vector.extract_strided_slice %82 {offsets = [0, 32], sizes = [8, 32], strides = [1, 1]} : vector<8x96xf32> to vector<8x32xf32>
    %85 = vector.extract_strided_slice %82 {offsets = [0, 64], sizes = [8, 32], strides = [1, 1]} : vector<8x96xf32> to vector<8x32xf32>
    %86 = vector.extract_strided_slice %76 {offsets = [0, 96], sizes = [8, 32], strides = [1, 1]} : vector<8x128xf32> to vector<8x32xf32>
    %87 = math.tanh %86 : vector<8x32xf32>
    %88 = arith.mulf %84, %68 : vector<8x32xf32>
    %89 = arith.mulf %83, %87 : vector<8x32xf32>
    %90 = arith.addf %88, %89 : vector<8x32xf32>
    %91 = math.tanh %90 : vector<8x32xf32>
    %92 = arith.mulf %85, %91 : vector<8x32xf32>
    %c4_i32 = arith.constant 4 : i32
    %c8_i32_19 = arith.constant 8 : i32
    %93 = arith.muli %c4_i32, %c8_i32_19 : i32
    %94 = tpu.assume_multiple %93, 8 : i32
    %95 = arith.index_cast %94 : i32 to index
    %c0_20 = arith.constant 0 : index
    %96 = vector.load %arg0[%95, %c0_20] : memref<64x128xf32, #tpu.memory_space<vmem>>, vector<8x128xf32>
    %cst_21 = arith.constant dense<0.000000e+00> : vector<8x128xf32>
    %97 = tpu.matmul %92, %0, %cst_21 {dimension_numbers = #tpu.dot_dimension_numbers<[1], [0], [0], [1], [0, 0, 1, 1], [], []>} : vector<8x32xf32>, vector<32x128xf32>, vector<8x128xf32> -> vector<8x128xf32>
    %98 = arith.addf %96, %97 : vector<8x128xf32>
    %99 = vector.extract_strided_slice %98 {offsets = [0, 0], sizes = [8, 96], strides = [1, 1]} : vector<8x128xf32> to vector<8x96xf32>
    %100 = arith.negf %99 : vector<8x96xf32>
    %101 = math.exp %100 : vector<8x96xf32>
    %cst_22 = arith.constant 1.000000e+00 : f32
    %102 = vector.broadcast %cst_22 : f32 to vector<8x96xf32>
    %103 = arith.addf %102, %101 : vector<8x96xf32>
    %104 = arith.divf %102, %103 : vector<8x96xf32>
    %105 = vector.extract_strided_slice %104 {offsets = [0, 0], sizes = [8, 32], strides = [1, 1]} : vector<8x96xf32> to vector<8x32xf32>
    %106 = vector.extract_strided_slice %104 {offsets = [0, 32], sizes = [8, 32], strides = [1, 1]} : vector<8x96xf32> to vector<8x32xf32>
    %107 = vector.extract_strided_slice %104 {offsets = [0, 64], sizes = [8, 32], strides = [1, 1]} : vector<8x96xf32> to vector<8x32xf32>
    %108 = vector.extract_strided_slice %98 {offsets = [0, 96], sizes = [8, 32], strides = [1, 1]} : vector<8x128xf32> to vector<8x32xf32>
    %109 = math.tanh %108 : vector<8x32xf32>
    %110 = arith.mulf %106, %90 : vector<8x32xf32>
    %111 = arith.mulf %105, %109 : vector<8x32xf32>
    %112 = arith.addf %110, %111 : vector<8x32xf32>
    %113 = math.tanh %112 : vector<8x32xf32>
    %114 = arith.mulf %107, %113 : vector<8x32xf32>
    %c5_i32 = arith.constant 5 : i32
    %c8_i32_23 = arith.constant 8 : i32
    %115 = arith.muli %c5_i32, %c8_i32_23 : i32
    %116 = tpu.assume_multiple %115, 8 : i32
    %117 = arith.index_cast %116 : i32 to index
    %c0_24 = arith.constant 0 : index
    %118 = vector.load %arg0[%117, %c0_24] : memref<64x128xf32, #tpu.memory_space<vmem>>, vector<8x128xf32>
    %cst_25 = arith.constant dense<0.000000e+00> : vector<8x128xf32>
    %119 = tpu.matmul %114, %0, %cst_25 {dimension_numbers = #tpu.dot_dimension_numbers<[1], [0], [0], [1], [0, 0, 1, 1], [], []>} : vector<8x32xf32>, vector<32x128xf32>, vector<8x128xf32> -> vector<8x128xf32>
    %120 = arith.addf %118, %119 : vector<8x128xf32>
    %121 = vector.extract_strided_slice %120 {offsets = [0, 0], sizes = [8, 96], strides = [1, 1]} : vector<8x128xf32> to vector<8x96xf32>
    %122 = arith.negf %121 : vector<8x96xf32>
    %123 = math.exp %122 : vector<8x96xf32>
    %cst_26 = arith.constant 1.000000e+00 : f32
    %124 = vector.broadcast %cst_26 : f32 to vector<8x96xf32>
    %125 = arith.addf %124, %123 : vector<8x96xf32>
    %126 = arith.divf %124, %125 : vector<8x96xf32>
    %127 = vector.extract_strided_slice %126 {offsets = [0, 0], sizes = [8, 32], strides = [1, 1]} : vector<8x96xf32> to vector<8x32xf32>
    %128 = vector.extract_strided_slice %126 {offsets = [0, 32], sizes = [8, 32], strides = [1, 1]} : vector<8x96xf32> to vector<8x32xf32>
    %129 = vector.extract_strided_slice %126 {offsets = [0, 64], sizes = [8, 32], strides = [1, 1]} : vector<8x96xf32> to vector<8x32xf32>
    %130 = vector.extract_strided_slice %120 {offsets = [0, 96], sizes = [8, 32], strides = [1, 1]} : vector<8x128xf32> to vector<8x32xf32>
    %131 = math.tanh %130 : vector<8x32xf32>
    %132 = arith.mulf %128, %112 : vector<8x32xf32>
    %133 = arith.mulf %127, %131 : vector<8x32xf32>
    %134 = arith.addf %132, %133 : vector<8x32xf32>
    %135 = math.tanh %134 : vector<8x32xf32>
    %136 = arith.mulf %129, %135 : vector<8x32xf32>
    %c6_i32 = arith.constant 6 : i32
    %c8_i32_27 = arith.constant 8 : i32
    %137 = arith.muli %c6_i32, %c8_i32_27 : i32
    %138 = tpu.assume_multiple %137, 8 : i32
    %139 = arith.index_cast %138 : i32 to index
    %c0_28 = arith.constant 0 : index
    %140 = vector.load %arg0[%139, %c0_28] : memref<64x128xf32, #tpu.memory_space<vmem>>, vector<8x128xf32>
    %cst_29 = arith.constant dense<0.000000e+00> : vector<8x128xf32>
    %141 = tpu.matmul %136, %0, %cst_29 {dimension_numbers = #tpu.dot_dimension_numbers<[1], [0], [0], [1], [0, 0, 1, 1], [], []>} : vector<8x32xf32>, vector<32x128xf32>, vector<8x128xf32> -> vector<8x128xf32>
    %142 = arith.addf %140, %141 : vector<8x128xf32>
    %143 = vector.extract_strided_slice %142 {offsets = [0, 0], sizes = [8, 96], strides = [1, 1]} : vector<8x128xf32> to vector<8x96xf32>
    %144 = arith.negf %143 : vector<8x96xf32>
    %145 = math.exp %144 : vector<8x96xf32>
    %cst_30 = arith.constant 1.000000e+00 : f32
    %146 = vector.broadcast %cst_30 : f32 to vector<8x96xf32>
    %147 = arith.addf %146, %145 : vector<8x96xf32>
    %148 = arith.divf %146, %147 : vector<8x96xf32>
    %149 = vector.extract_strided_slice %148 {offsets = [0, 0], sizes = [8, 32], strides = [1, 1]} : vector<8x96xf32> to vector<8x32xf32>
    %150 = vector.extract_strided_slice %148 {offsets = [0, 32], sizes = [8, 32], strides = [1, 1]} : vector<8x96xf32> to vector<8x32xf32>
    %151 = vector.extract_strided_slice %148 {offsets = [0, 64], sizes = [8, 32], strides = [1, 1]} : vector<8x96xf32> to vector<8x32xf32>
    %152 = vector.extract_strided_slice %142 {offsets = [0, 96], sizes = [8, 32], strides = [1, 1]} : vector<8x128xf32> to vector<8x32xf32>
    %153 = math.tanh %152 : vector<8x32xf32>
    %154 = arith.mulf %150, %134 : vector<8x32xf32>
    %155 = arith.mulf %149, %153 : vector<8x32xf32>
    %156 = arith.addf %154, %155 : vector<8x32xf32>
    %157 = math.tanh %156 : vector<8x32xf32>
    %158 = arith.mulf %151, %157 : vector<8x32xf32>
    %c7_i32 = arith.constant 7 : i32
    %c8_i32_31 = arith.constant 8 : i32
    %159 = arith.muli %c7_i32, %c8_i32_31 : i32
    %160 = tpu.assume_multiple %159, 8 : i32
    %161 = arith.index_cast %160 : i32 to index
    %c0_32 = arith.constant 0 : index
    %162 = vector.load %arg0[%161, %c0_32] : memref<64x128xf32, #tpu.memory_space<vmem>>, vector<8x128xf32>
    %cst_33 = arith.constant dense<0.000000e+00> : vector<8x128xf32>
    %163 = tpu.matmul %158, %0, %cst_33 {dimension_numbers = #tpu.dot_dimension_numbers<[1], [0], [0], [1], [0, 0, 1, 1], [], []>} : vector<8x32xf32>, vector<32x128xf32>, vector<8x128xf32> -> vector<8x128xf32>
    %164 = arith.addf %162, %163 : vector<8x128xf32>
    %165 = vector.extract_strided_slice %164 {offsets = [0, 0], sizes = [8, 96], strides = [1, 1]} : vector<8x128xf32> to vector<8x96xf32>
    %166 = arith.negf %165 : vector<8x96xf32>
    %167 = math.exp %166 : vector<8x96xf32>
    %cst_34 = arith.constant 1.000000e+00 : f32
    %168 = vector.broadcast %cst_34 : f32 to vector<8x96xf32>
    %169 = arith.addf %168, %167 : vector<8x96xf32>
    %170 = arith.divf %168, %169 : vector<8x96xf32>
    %171 = vector.extract_strided_slice %170 {offsets = [0, 0], sizes = [8, 32], strides = [1, 1]} : vector<8x96xf32> to vector<8x32xf32>
    %172 = vector.extract_strided_slice %170 {offsets = [0, 32], sizes = [8, 32], strides = [1, 1]} : vector<8x96xf32> to vector<8x32xf32>
    %173 = vector.extract_strided_slice %170 {offsets = [0, 64], sizes = [8, 32], strides = [1, 1]} : vector<8x96xf32> to vector<8x32xf32>
    %174 = vector.extract_strided_slice %164 {offsets = [0, 96], sizes = [8, 32], strides = [1, 1]} : vector<8x128xf32> to vector<8x32xf32>
    %175 = math.tanh %174 : vector<8x32xf32>
    %176 = arith.mulf %172, %156 : vector<8x32xf32>
    %177 = arith.mulf %171, %175 : vector<8x32xf32>
    %178 = arith.addf %176, %177 : vector<8x32xf32>
    %179 = math.tanh %178 : vector<8x32xf32>
    %180 = arith.mulf %173, %179 : vector<8x32xf32>
    %c8_i32_35 = arith.constant 8 : i32
    %cst_36 = arith.constant dense<0.000000e+00> : vector<8x128xf32>
    %181 = tpu.matmul %180, %1, %cst_36 {dimension_numbers = #tpu.dot_dimension_numbers<[1], [0], [0], [1], [0, 0, 1, 1], [], []>} : vector<8x32xf32>, vector<32x128xf32>, vector<8x128xf32> -> vector<8x128xf32>
    %182 = vector.broadcast %2 : vector<1x128xf32> to vector<8x128xf32>
    %183 = arith.addf %181, %182 : vector<8x128xf32>
    %184 = tpu.iota {dimensions = array<i32: 1>} : vector<8x128xi32>
    %c4_i32_37 = arith.constant 4 : i32
    %185 = vector.broadcast %c4_i32_37 : i32 to vector<8x128xi32>
    %186 = arith.cmpi slt, %184, %185 : vector<8x128xi32>
    %cst_38 = arith.constant -1.000000e+30 : f32
    %187 = vector.broadcast %cst_38 : f32 to vector<8x128xf32>
    %188 = arith.select %186, %183, %187 : vector<8x128xi1>, vector<8x128xf32>
    %cst_39 = arith.constant dense<0xFF800000> : vector<8xf32>
    %189 = vector.multi_reduction <maximumf>, %188, %cst_39 [1] : vector<8x128xf32> to vector<8xf32>
    %190 = vector.shape_cast %189 : vector<8xf32> to vector<8x1xf32>
    %191 = vector.broadcast %190 : vector<8x1xf32> to vector<8x128xf32>
    %192 = arith.subf %188, %191 : vector<8x128xf32>
    %193 = math.exp %192 : vector<8x128xf32>
    %cst_40 = arith.constant dense<0.000000e+00> : vector<8xf32>
    %194 = vector.multi_reduction <add>, %193, %cst_40 [1] : vector<8x128xf32> to vector<8xf32>
    %195 = vector.shape_cast %194 : vector<8xf32> to vector<8x1xf32>
    %196 = math.log %195 : vector<8x1xf32>
    %197 = vector.broadcast %196 : vector<8x1xf32> to vector<8x128xf32>
    %198 = arith.subf %192, %197 : vector<8x128xf32>
    %199 = tpu.iota {dimensions = array<i32: 1>} : vector<8x64xi32>
    %c4_i32_41 = arith.constant 4 : i32
    %200 = vector.broadcast %c4_i32_41 : i32 to vector<8x64xi32>
    %201 = arith.cmpi slt, %199, %200 : vector<8x64xi32>
    %202 = vector.extract_strided_slice %198 {offsets = [0, 0], sizes = [8, 64], strides = [1, 1]} : vector<8x128xf32> to vector<8x64xf32>
    %cst_42 = arith.constant 0.000000e+00 : f32
    %203 = vector.broadcast %cst_42 : f32 to vector<8x64xf32>
    %204 = arith.select %201, %202, %203 : vector<8x64xi1>, vector<8x64xf32>
    %205 = tpu.concatenate %180, %178, %204 in 1 : vector<8x32xf32>, vector<8x32xf32>, vector<8x64xf32> -> vector<8x128xf32>
    %c0_43 = arith.constant 0 : index
    %c0_44 = arith.constant 0 : index
    %206 = vector.load %arg2[%c0_43, %c0_44] : memref<8x128xf32, #tpu.memory_space<vmem>>, vector<8x128xf32>
    tpu.vector_store %arg2[%c0_43, %c0_44], %205 {strides = array<i32>} : memref<8x128xf32, #tpu.memory_space<vmem>>, vector<8x128xf32>,
    return
  }
}

</mosaic_0001>

<llo_original>
// kernel: rnn_forward.1
$region0: #{rnn_forward.1}
  #allocation0 [shape = 'u32[]', space=smem, size = 0x4, offset = 0x4, fixed_abs, tag = 'smem constant byte address 0x4 - core index']
  #allocation1 [shape = 'u32[72,128]{1,0:T(1,128)}', space=vmem, size = 0x9000, scoped, tag = 'internal scratch']
  %s0 = inlined_call_operand.vmem [shape: f32[64,128], index: 0, kind: input, shape index: {}]
  %s1 = inlined_call_operand.vmem [shape: f32[72,128], index: 1, kind: input, shape index: {}]
  %s2 = inlined_call_operand.vmem [shape: f32[8,128], index: 2, kind: output, shape index: {}]
  %s3 = sld [smem:[#allocation0]]
  $region18: #{rnn_forward.1} parent=0
    _
  %s5 = ssub.s32 1, %s3
  %s6 = scalar_select 0, %s5, %s3
  // Predicated region
  $region2: #{rnn_forward.1} parent=0 // pred_check
    _
  $region3: #{rnn_forward.1} parent=0 // pred_check_branch
    %8 = sbr.rel (0) target = $region5
  $region4: #{rnn_forward.1} parent=0 // pred_region
    _
  $region5: #{rnn_forward.1} parent=0 // pred_fallthru
    _
  // Predicated region
  $region6: #{rnn_forward.1} parent=0 // pred_check
    _
  $region7: #{rnn_forward.1} parent=0 // pred_check_branch
    %10 = sbr.rel (0) target = $region9
  $region8: #{rnn_forward.1} parent=0 // pred_region
    _
  $region9: #{rnn_forward.1} parent=0 // pred_fallthru
    _
  %v11 = vld [vmem:[%s1] sm:$0xff]
  %v12 = vld [vmem:[%s1 + $0x8] sm:$0xff]
  %v13 = vld [vmem:[%s1 + $0x10] sm:$0xff]
  %v14 = vld [vmem:[%s1 + $0x18] sm:$0xff]
  %v15 = vld [vmem:[%s1 + $0x20] sm:$0xff]
  %v16 = vld [vmem:[%s1 + $0x28] sm:$0xff]
  %v17 = vld [vmem:[%s1 + $0x30] sm:$0xff]
  %v18 = vld [vmem:[%s1 + $0x38] sm:$0xff]
  %v19 = vld [vmem:[%s1 + $0x40] sm:$0x1]
  %v20 = vld [vmem:[%s0] sm:$0xff]
  %vm21 = vcmask 261120
  %v23 = vsel %vm21, 0.0, 0
  %25 = vmatpush.msra.mxu0 0.0
  %26 = vmatpush.msra.mxu0 0.0
  %27 = vmatpush.msra.mxu0 0.0
  %28 = vmatpush.msra.mxu0 0.0
  %29 = vmatpush.msra.mxu0 0.0
  %30 = vmatpush.msra.mxu0 0.0
  %31 = vmatpush.msra.mxu0 0.0
  %32 = vmatpush.msra.mxu0 0.0
  %33 = vmatpush.msra.mxu0 0.0
  %34 = vmatpush.msra.mxu0 0.0
  %35 = vmatpush.msra.mxu0 0.0
  %36 = vmatpush.msra.mxu0 0.0
  %37 = vmatpush.msra.mxu0 %v14
  %38 = vmatpush.msra.mxu0 %v13
  %39 = vmatpush.msra.mxu0 %v12
  %40 = vmatpush.msra.mxu0 %v11
  %41 = vmatmul.f32.gmra.mxu0 %v23
  %v42 = vpop.f32.mrf.mxu0
  %v43 = vadd.f32 0.0, %v42
  %44 = vdwg.mxu0
  %v45 = vadd.f32 %v20, %v43
  %v46 = vxor.u32 %v45, 2147483648
  %v47 = vmul.f32 %v46, 1.442695
  %v48 = vpow.pop %v47
  %v49 = vadd.f32 %v48, 1.0
  %v50 = vrcp.pop %v49
  %v51 = vmul.f32 %v49, %v50
  %v52 = vsub.f32 1.0, %v51
  %v53 = vmul.f32 %v50, %v52
  %v54 = vadd.f32 %v50, %v53
  %vm55 = vweird.f32 %v49
  %vm56 = vweird.f32 %v50
  %vm57 = vmor %vm55, %vm56
  %v58 = vsel %vm57, %v50, %v54
  %v59 = vand.u32 2147483647, %v49
  %vm60 = vcmp.eq.f32.partialorder %v59, 8.507059e+37
  %v61 = vand.u32 %v49, 2147483648
  %v62 = vor.u32 1.1754944e-38, %v61
  %v63 = vsel %vm60, %v62, %v58
  %v64 = vmul.f32 1.0, %v63
  %v65 = vtanh.pop %v45
  %v66 = vmul.f32 %v64, 0.0
  %68 = vrot.lane.b32.xlu0 %v65, 32
  %v69 = vpop.permute.xlu0 %68
  %v71 = vmul.f32 %v64, %v69
  %73 = vrot.lane.b32.xlu0 %v71, 32
  %v74 = vpop.permute.xlu0 %73
  %v76 = vadd.f32 %v66, %v74
  %v77 = vtanh.pop %v76
  %79 = vrot.lane.b32.xlu0 %v77, 32
  %v80 = vpop.permute.xlu0 %79
  %v82 = vmul.f32 %v64, %v80
  %s83 = scalar_lea.vmem %s0, 8
  %v84 = vld [vmem:[%s83] sm:$0xff]
  %86 = vrot.lane.b32.xlu0 %v82, 64
  %v87 = vpop.permute.xlu0 %86
  %v88 = vsel %vm21, %v87, 0
  %90 = vmatpush.msra.mxu0 0.0
  %91 = vmatpush.msra.mxu0 0.0
  %92 = vmatpush.msra.mxu0 0.0
  %93 = vmatpush.msra.mxu0 0.0
  %94 = vmatpush.msra.mxu0 0.0
  %95 = vmatpush.msra.mxu0 0.0
  %96 = vmatpush.msra.mxu0 0.0
  %97 = vmatpush.msra.mxu0 0.0
  %98 = vmatpush.msra.mxu0 0.0
  %99 = vmatpush.msra.mxu0 0.0
  %100 = vmatpush.msra.mxu0 0.0
  %101 = vmatpush.msra.mxu0 0.0
  %102 = vmatpush.msra.mxu0 %v14
  %103 = vmatpush.msra.mxu0 %v13
  %104 = vmatpush.msra.mxu0 %v12
  %105 = vmatpush.msra.mxu0 %v11
  %106 = vmatmul.f32.gmra.mxu0 %v88
  %v107 = vpop.f32.mrf.mxu0
  %v108 = vadd.f32 0.0, %v107
  %109 = vdwg.mxu0
  %v110 = vadd.f32 %v84, %v108
  %v111 = vxor.u32 %v110, 2147483648
  %v112 = vmul.f32 %v111, 1.442695
  %v113 = vpow.pop %v112
  %v114 = vadd.f32 %v113, 1.0
  %v115 = vrcp.pop %v114
  %v116 = vmul.f32 %v114, %v115
  %v117 = vsub.f32 1.0, %v116
  %v118 = vmul.f32 %v115, %v117
  %v119 = vadd.f32 %v115, %v118
  %vm120 = vweird.f32 %v114
  %vm121 = vweird.f32 %v115
  %vm122 = vmor %vm120, %vm121
  %v123 = vsel %vm122, %v115, %v119
  %v124 = vand.u32 2147483647, %v114
  %vm125 = vcmp.eq.f32.partialorder %v124, 8.507059e+37
  %v126 = vand.u32 %v114, 2147483648
  %v127 = vor.u32 1.1754944e-38, %v126
  %v128 = vsel %vm125, %v127, %v123
  %v129 = vmul.f32 1.0, %v128
  %v130 = vtanh.pop %v110
  %v131 = vmul.f32 %v129, %v76
  %133 = vrot.lane.b32.xlu0 %v130, 32
  %v134 = vpop.permute.xlu0 %133
  %v136 = vmul.f32 %v129, %v134
  %138 = vrot.lane.b32.xlu0 %v136, 32
  %v139 = vpop.permute.xlu0 %138
  %v141 = vadd.f32 %v131, %v139
  %v142 = vtanh.pop %v141
  %144 = vrot.lane.b32.xlu0 %v142, 32
  %v145 = vpop.permute.xlu0 %144
  %v147 = vmul.f32 %v129, %v145
  %s148 = scalar_lea.vmem %s0, 16
  %v149 = vld [vmem:[%s148] sm:$0xff]
  %151 = vrot.lane.b32.xlu0 %v147, 64
  %v152 = vpop.permute.xlu0 %151
  %v153 = vsel %vm21, %v152, 0
  %155 = vmatpush.msra.mxu0 0.0
  %156 = vmatpush.msra.mxu0 0.0
  %157 = vmatpush.msra.mxu0 0.0
  %158 = vmatpush.msra.mxu0 0.0
  %159 = vmatpush.msra.mxu0 0.0
  %160 = vmatpush.msra.mxu0 0.0
  %161 = vmatpush.msra.mxu0 0.0
  %162 = vmatpush.msra.mxu0 0.0
  %163 = vmatpush.msra.mxu0 0.0
  %164 = vmatpush.msra.mxu0 0.0
  %165 = vmatpush.msra.mxu0 0.0
  %166 = vmatpush.msra.mxu0 0.0
  %167 = vmatpush.msra.mxu0 %v14
  %168 = vmatpush.msra.mxu0 %v13
  %169 = vmatpush.msra.mxu0 %v12
  %170 = vmatpush.msra.mxu0 %v11
  %171 = vmatmul.f32.gmra.mxu0 %v153
  %v172 = vpop.f32.mrf.mxu0
  %v173 = vadd.f32 0.0, %v172
  %174 = vdwg.mxu0
  %v175 = vadd.f32 %v149, %v173
  %v176 = vxor.u32 %v175, 2147483648
  %v177 = vmul.f32 %v176, 1.442695
  %v178 = vpow.pop %v177
  %v179 = vadd.f32 %v178, 1.0
  %v180 = vrcp.pop %v179
  %v181 = vmul.f32 %v179, %v180
  %v182 = vsub.f32 1.0, %v181
  %v183 = vmul.f32 %v180, %v182
  %v184 = vadd.f32 %v180, %v183
  %vm185 = vweird.f32 %v179
  %vm186 = vweird.f32 %v180
  %vm187 = vmor %vm185, %vm186
  %v188 = vsel %vm187, %v180, %v184
  %v189 = vand.u32 2147483647, %v179
  %vm190 = vcmp.eq.f32.partialorder %v189, 8.507059e+37
  %v191 = vand.u32 %v179, 2147483648
  %v192 = vor.u32 1.1754944e-38, %v191
  %v193 = vsel %vm190, %v192, %v188
  %v194 = vmul.f32 1.0, %v193
  %v195 = vtanh.pop %v175
  %v196 = vmul.f32 %v194, %v141
  %198 = vrot.lane.b32.xlu0 %v195, 32
  %v199 = vpop.permute.xlu0 %198
  %v201 = vmul.f32 %v194, %v199
  %203 = vrot.lane.b32.xlu0 %v201, 32
  %v204 = vpop.permute.xlu0 %203
  %v206 = vadd.f32 %v196, %v204
  %v207 = vtanh.pop %v206
  %209 = vrot.lane.b32.xlu0 %v207, 32
  %v210 = vpop.permute.xlu0 %209
  %v212 = vmul.f32 %v194, %v210
  %s213 = scalar_lea.vmem %s0, 24
  %v214 = vld [vmem:[%s213] sm:$0xff]
  %216 = vrot.lane.b32.xlu0 %v212, 64
  %v217 = vpop.permute.xlu0 %216
  %v218 = vsel %vm21, %v217, 0
  %220 = vmatpush.msra.mxu0 0.0
  %221 = vmatpush.msra.mxu0 0.0
  %222 = vmatpush.msra.mxu0 0.0
  %223 = vmatpush.msra.mxu0 0.0
  %224 = vmatpush.msra.mxu0 0.0
  %225 = vmatpush.msra.mxu0 0.0
  %226 = vmatpush.msra.mxu0 0.0
  %227 = vmatpush.msra.mxu0 0.0
  %228 = vmatpush.msra.mxu0 0.0
  %229 = vmatpush.msra.mxu0 0.0
  %230 = vmatpush.msra.mxu0 0.0
  %231 = vmatpush.msra.mxu0 0.0
  %232 = vmatpush.msra.mxu0 %v14
  %233 = vmatpush.msra.mxu0 %v13
  %234 = vmatpush.msra.mxu0 %v12
  %235 = vmatpush.msra.mxu0 %v11
  %236 = vmatmul.f32.gmra.mxu0 %v218
  %v237 = vpop.f32.mrf.mxu0
  %v238 = vadd.f32 0.0, %v237
  %239 = vdwg.mxu0
  %v240 = vadd.f32 %v214, %v238
  %v241 = vxor.u32 %v240, 2147483648
  %v242 = vmul.f32 %v241, 1.442695
  %v243 = vpow.pop %v242
  %v244 = vadd.f32 %v243, 1.0
  %v245 = vrcp.pop %v244
  %v246 = vmul.f32 %v244, %v245
  %v247 = vsub.f32 1.0, %v246
  %v248 = vmul.f32 %v245, %v247
  %v249 = vadd.f32 %v245, %v248
  %vm250 = vweird.f32 %v244
  %vm251 = vweird.f32 %v245
  %vm252 = vmor %vm250, %vm251
  %v253 = vsel %vm252, %v245, %v249
  %v254 = vand.u32 2147483647, %v244
  %vm255 = vcmp.eq.f32.partialorder %v254, 8.507059e+37
  %v256 = vand.u32 %v244, 2147483648
  %v257 = vor.u32 1.1754944e-38, %v256
  %v258 = vsel %vm255, %v257, %v253
  %v259 = vmul.f32 1.0, %v258
  %v260 = vtanh.pop %v240
  %v261 = vmul.f32 %v259, %v206
  %263 = vrot.lane.b32.xlu0 %v260, 32
  %v264 = vpop.permute.xlu0 %263
  %v266 = vmul.f32 %v259, %v264
  %268 = vrot.lane.b32.xlu0 %v266, 32
  %v269 = vpop.permute.xlu0 %268
  %v271 = vadd.f32 %v261, %v269
  %v272 = vtanh.pop %v271
  %274 = vrot.lane.b32.xlu0 %v272, 32
  %v275 = vpop.permute.xlu0 %274
  %v277 = vmul.f32 %v259, %v275
  %s278 = scalar_lea.vmem %s0, 32
  %v279 = vld [vmem:[%s278] sm:$0xff]
  %281 = vrot.lane.b32.xlu0 %v277, 64
  %v282 = vpop.permute.xlu0 %281
  %v283 = vsel %vm21, %v282, 0
  %285 = vmatpush.msra.mxu0 0.0
  %286 = vmatpush.msra.mxu0 0.0
  %287 = vmatpush.msra.mxu0 0.0
  %288 = vmatpush.msra.mxu0 0.0
  %289 = vmatpush.msra.mxu0 0.0
  %290 = vmatpush.msra.mxu0 0.0
  %291 = vmatpush.msra.mxu0 0.0
  %292 = vmatpush.msra.mxu0 0.0
  %293 = vmatpush.msra.mxu0 0.0
  %294 = vmatpush.msra.mxu0 0.0
  %295 = vmatpush.msra.mxu0 0.0
  %296 = vmatpush.msra.mxu0 0.0
  %297 = vmatpush.msra.mxu0 %v14
  %298 = vmatpush.msra.mxu0 %v13
  %299 = vmatpush.msra.mxu0 %v12
  %300 = vmatpush.msra.mxu0 %v11
  %301 = vmatmul.f32.gmra.mxu0 %v283
  %v302 = vpop.f32.mrf.mxu0
  %v303 = vadd.f32 0.0, %v302
  %304 = vdwg.mxu0
  %v305 = vadd.f32 %v279, %v303
  %v306 = vxor.u32 %v305, 2147483648
  %v307 = vmul.f32 %v306, 1.442695
  %v308 = vpow.pop %v307
  %v309 = vadd.f32 %v308, 1.0
  %v310 = vrcp.pop %v309
  %v311 = vmul.f32 %v309, %v310
  %v312 = vsub.f32 1.0, %v311
  %v313 = vmul.f32 %v310, %v312
  %v314 = vadd.f32 %v310, %v313
  %vm315 = vweird.f32 %v309
  %vm316 = vweird.f32 %v310
  %vm317 = vmor %vm315, %vm316
  %v318 = vsel %vm317, %v310, %v314
  %v319 = vand.u32 2147483647, %v309
  %vm320 = vcmp.eq.f32.partialorder %v319, 8.507059e+37
  %v321 = vand.u32 %v309, 2147483648
  %v322 = vor.u32 1.1754944e-38, %v321
  %v323 = vsel %vm320, %v322, %v318
  %v324 = vmul.f32 1.0, %v323
  %v325 = vtanh.pop %v305
  %v326 = vmul.f32 %v324, %v271
  %328 = vrot.lane.b32.xlu0 %v325, 32
  %v329 = vpop.permute.xlu0 %328
  %v331 = vmul.f32 %v324, %v329
  %333 = vrot.lane.b32.xlu0 %v331, 32
  %v334 = vpop.permute.xlu0 %333
  %v336 = vadd.f32 %v326, %v334
  %v337 = vtanh.pop %v336
  %339 = vrot.lane.b32.xlu0 %v337, 32
  %v340 = vpop.permute.xlu0 %339
  %v342 = vmul.f32 %v324, %v340
  %s343 = scalar_lea.vmem %s0, 40
  %v344 = vld [vmem:[%s343] sm:$0xff]
  %346 = vrot.lane.b32.xlu0 %v342, 64
  %v347 = vpop.permute.xlu0 %346
  %v348 = vsel %vm21, %v347, 0
  %350 = vmatpush.msra.mxu0 0.0
  %351 = vmatpush.msra.mxu0 0.0
  %352 = vmatpush.msra.mxu0 0.0
  %353 = vmatpush.msra.mxu0 0.0
  %354 = vmatpush.msra.mxu0 0.0
  %355 = vmatpush.msra.mxu0 0.0
  %356 = vmatpush.msra.mxu0 0.0
  %357 = vmatpush.msra.mxu0 0.0
  %358 = vmatpush.msra.mxu0 0.0
  %359 = vmatpush.msra.mxu0 0.0
  %360 = vmatpush.msra.mxu0 0.0
  %361 = vmatpush.msra.mxu0 0.0
  %362 = vmatpush.msra.mxu0 %v14
  %363 = vmatpush.msra.mxu0 %v13
  %364 = vmatpush.msra.mxu0 %v12
  %365 = vmatpush.msra.mxu0 %v11
  %366 = vmatmul.f32.gmra.mxu0 %v348
  %v367 = vpop.f32.mrf.mxu0
  %v368 = vadd.f32 0.0, %v367
  %369 = vdwg.mxu0
  %v370 = vadd.f32 %v344, %v368
  %v371 = vxor.u32 %v370, 2147483648
  %v372 = vmul.f32 %v371, 1.442695
  %v373 = vpow.pop %v372
  %v374 = vadd.f32 %v373, 1.0
  %v375 = vrcp.pop %v374
  %v376 = vmul.f32 %v374, %v375
  %v377 = vsub.f32 1.0, %v376
  %v378 = vmul.f32 %v375, %v377
  %v379 = vadd.f32 %v375, %v378
  %vm380 = vweird.f32 %v374
  %vm381 = vweird.f32 %v375
  %vm382 = vmor %vm380, %vm381
  %v383 = vsel %vm382, %v375, %v379
  %v384 = vand.u32 2147483647, %v374
  %vm385 = vcmp.eq.f32.partialorder %v384, 8.507059e+37
  %v386 = vand.u32 %v374, 2147483648
  %v387 = vor.u32 1.1754944e-38, %v386
  %v388 = vsel %vm385, %v387, %v383
  %v389 = vmul.f32 1.0, %v388
  %v390 = vtanh.pop %v370
  %v391 = vmul.f32 %v389, %v336
  %393 = vrot.lane.b32.xlu0 %v390, 32
  %v394 = vpop.permute.xlu0 %393
  %v396 = vmul.f32 %v389, %v394
  %398 = vrot.lane.b32.xlu0 %v396, 32
  %v399 = vpop.permute.xlu0 %398
  %v401 = vadd.f32 %v391, %v399
  %v402 = vtanh.pop %v401
  %404 = vrot.lane.b32.xlu0 %v402, 32
  %v405 = vpop.permute.xlu0 %404
  %v407 = vmul.f32 %v389, %v405
  %s408 = scalar_lea.vmem %s0, 48
  %v409 = vld [vmem:[%s408] sm:$0xff]
  %411 = vrot.lane.b32.xlu0 %v407, 64
  %v412 = vpop.permute.xlu0 %411
  %v413 = vsel %vm21, %v412, 0
  %415 = vmatpush.msra.mxu0 0.0
  %416 = vmatpush.msra.mxu0 0.0
  %417 = vmatpush.msra.mxu0 0.0
  %418 = vmatpush.msra.mxu0 0.0
  %419 = vmatpush.msra.mxu0 0.0
  %420 = vmatpush.msra.mxu0 0.0
  %421 = vmatpush.msra.mxu0 0.0
  %422 = vmatpush.msra.mxu0 0.0
  %423 = vmatpush.msra.mxu0 0.0
  %424 = vmatpush.msra.mxu0 0.0
  %425 = vmatpush.msra.mxu0 0.0
  %426 = vmatpush.msra.mxu0 0.0
  %427 = vmatpush.msra.mxu0 %v14
  %428 = vmatpush.msra.mxu0 %v13
  %429 = vmatpush.msra.mxu0 %v12
  %430 = vmatpush.msra.mxu0 %v11
  %431 = vmatmul.f32.gmra.mxu0 %v413
  %v432 = vpop.f32.mrf.mxu0
  %v433 = vadd.f32 0.0, %v432
  %434 = vdwg.mxu0
  %v435 = vadd.f32 %v409, %v433
  %v436 = vxor.u32 %v435, 2147483648
  %v437 = vmul.f32 %v436, 1.442695
  %v438 = vpow.pop %v437
  %v439 = vadd.f32 %v438, 1.0
  %v440 = vrcp.pop %v439
  %v441 = vmul.f32 %v439, %v440
  %v442 = vsub.f32 1.0, %v441
  %v443 = vmul.f32 %v440, %v442
  %v444 = vadd.f32 %v440, %v443
  %vm445 = vweird.f32 %v439
  %vm446 = vweird.f32 %v440
  %vm447 = vmor %vm445, %vm446
  %v448 = vsel %vm447, %v440, %v444
  %v449 = vand.u32 2147483647, %v439
  %vm450 = vcmp.eq.f32.partialorder %v449, 8.507059e+37
  %v451 = vand.u32 %v439, 2147483648
  %v452 = vor.u32 1.1754944e-38, %v451
  %v453 = vsel %vm450, %v452, %v448
  %v454 = vmul.f32 1.0, %v453
  %v455 = vtanh.pop %v435
  %v456 = vmul.f32 %v454, %v401
  %458 = vrot.lane.b32.xlu0 %v455, 32
  %v459 = vpop.permute.xlu0 %458
  %v461 = vmul.f32 %v454, %v459
  %463 = vrot.lane.b32.xlu0 %v461, 32
  %v464 = vpop.permute.xlu0 %463
  %v466 = vadd.f32 %v456, %v464
  %v467 = vtanh.pop %v466
  %469 = vrot.lane.b32.xlu0 %v467, 32
  %v470 = vpop.permute.xlu0 %469
  %v472 = vmul.f32 %v454, %v470
  %s473 = scalar_lea.vmem %s0, 56
  %v474 = vld [vmem:[%s473] sm:$0xff]
  %476 = vrot.lane.b32.xlu0 %v472, 64
  %v477 = vpop.permute.xlu0 %476
  %v478 = vsel %vm21, %v477, 0
  %480 = vmatpush.msra.mxu0 0.0
  %481 = vmatpush.msra.mxu0 0.0
  %482 = vmatpush.msra.mxu0 0.0
  %483 = vmatpush.msra.mxu0 0.0
  %484 = vmatpush.msra.mxu0 0.0
  %485 = vmatpush.msra.mxu0 0.0
  %486 = vmatpush.msra.mxu0 0.0
  %487 = vmatpush.msra.mxu0 0.0
  %488 = vmatpush.msra.mxu0 0.0
  %489 = vmatpush.msra.mxu0 0.0
  %490 = vmatpush.msra.mxu0 0.0
  %491 = vmatpush.msra.mxu0 0.0
  %492 = vmatpush.msra.mxu0 %v14
  %493 = vmatpush.msra.mxu0 %v13
  %494 = vmatpush.msra.mxu0 %v12
  %495 = vmatpush.msra.mxu0 %v11
  %496 = vmatmul.f32.gmra.mxu0 %v478
  %v497 = vpop.f32.mrf.mxu0
  %v498 = vadd.f32 0.0, %v497
  %499 = vdwg.mxu0
  %v500 = vadd.f32 %v474, %v498
  %v501 = vxor.u32 %v500, 2147483648
  %v502 = vmul.f32 %v501, 1.442695
  %v503 = vpow.pop %v502
  %v504 = vadd.f32 %v503, 1.0
  %v505 = vrcp.pop %v504
  %v506 = vmul.f32 %v504, %v505
  %v507 = vsub.f32 1.0, %v506
  %v508 = vmul.f32 %v505, %v507
  %v509 = vadd.f32 %v505, %v508
  %vm510 = vweird.f32 %v504
  %vm511 = vweird.f32 %v505
  %vm512 = vmor %vm510, %vm511
  %v513 = vsel %vm512, %v505, %v509
  %v514 = vand.u32 2147483647, %v504
  %vm515 = vcmp.eq.f32.partialorder %v514, 8.507059e+37
  %v516 = vand.u32 %v504, 2147483648
  %v517 = vor.u32 1.1754944e-38, %v516
  %v518 = vsel %vm515, %v517, %v513
  %v519 = vmul.f32 1.0, %v518
  %v520 = vtanh.pop %v500
  %v521 = vmul.f32 %v519, %v466
  %523 = vrot.lane.b32.xlu0 %v520, 32
  %v524 = vpop.permute.xlu0 %523
  %v526 = vmul.f32 %v519, %v524
  %528 = vrot.lane.b32.xlu0 %v526, 32
  %v529 = vpop.permute.xlu0 %528
  %v531 = vadd.f32 %v521, %v529
  %v532 = vtanh.pop %v531
  %534 = vrot.lane.b32.xlu0 %v532, 32
  %v535 = vpop.permute.xlu0 %534
  %v537 = vmul.f32 %v519, %v535
  %v538 = vperm.slane %v19, 0
  %540 = vrot.lane.b32.xlu0 %v537, 64
  %v541 = vpop.permute.xlu0 %540
  %v542 = vsel %vm21, %v541, 0
  %544 = vmatpush.msra.mxu0 0.0
  %545 = vmatpush.msra.mxu0 0.0
  %546 = vmatpush.msra.mxu0 0.0
  %547 = vmatpush.msra.mxu0 0.0
  %548 = vmatpush.msra.mxu0 0.0
  %549 = vmatpush.msra.mxu0 0.0
  %550 = vmatpush.msra.mxu0 0.0
  %551 = vmatpush.msra.mxu0 0.0
  %552 = vmatpush.msra.mxu0 0.0
  %553 = vmatpush.msra.mxu0 0.0
  %554 = vmatpush.msra.mxu0 0.0
  %555 = vmatpush.msra.mxu0 0.0
  %556 = vmatpush.msra.mxu0 %v18
  %557 = vmatpush.msra.mxu0 %v17
  %558 = vmatpush.msra.mxu0 %v16
  %559 = vmatpush.msra.mxu0 %v15
  %560 = vmatmul.f32.gmra.mxu0 %v542
  %v561 = vpop.f32.mrf.mxu0
  %v562 = vadd.f32 %v538, %v561
  %563 = vdwg.mxu0
  %v564 = vlaneseq
  %v565 = vand.u32 %v564, 127
  %vm566 = vcmp.lt.s32.totalorder %v565, 4
  %v567 = vsel %vm566, %v562, -1e+30
  %568 = vmax.xlane.f32.xlu0 %v567
  %v569 = vpop.xlane.xlu0 %568
  %v570 = vsub.f32 %v567, %v569
  %v571 = vmul.f32 %v570, 1.442695
  %v572 = vpow.pop %v571
  %573 = vadd.xlane.f32.xlu0 %v572
  %v574 = vpop.xlane.xlu0 %573
  %v575 = vlog2.pop %v574
  %v576 = vmul.f32 %v575, 0.6931472
  %v577 = vsub.f32 %v570, %v576
  %v578 = vsel %vm566, %v577, 0.0
  %581 = vrot.lane.b32.xlu0 %v578, 64
  %v582 = vpop.permute.xlu0 %581
  %v584 = vsel %vm21, %v541, %v531
  %vm585 = vcmask 523264
  %v586 = vsel %vm585, %v584, %v582
  %587 = vst [vmem:[%s2] sm:$0xff] %v586
  // Predicated region
  $region10: #{rnn_forward.1} parent=0 // pred_check
    _
  $region11: #{rnn_forward.1} parent=0 // pred_check_branch
    %589 = sbr.rel (0) target = $region13
  $region12: #{rnn_forward.1} parent=0 // pred_region
    _
  $region13: #{rnn_forward.1} parent=0 // pred_fallthru
    _
  // Predicated region
  $region14: #{rnn_forward.1} parent=0 // pred_check
    _
  $region15: #{rnn_forward.1} parent=0 // pred_check_branch
    %591 = sbr.rel (0) target = $region17
  $region16: #{rnn_forward.1} parent=0 // pred_region
    _
  $region17: #{rnn_forward.1} parent=0 // pred_fallthru
    _

</llo_original>
